<compile_context>
chip_gen: v6e
topology: v6e:2x2x1
jax: 0.10.0
libtpu: 0.0.40
codegen_flags: <defaults>
</compile_context>

<pallas_src>
import jax
import jax.numpy as jnp
from jax import lax
from jax.experimental import pallas as pl
from jax.experimental.pallas import tpu as pltpu

_NCORES = 2          # leading "parallel" grid axis (both TCs on v7x)
_LANES = 128
_SUBLANES = 8
_VMEM_LIMIT = 32 * 1024 * 1024       # scoped VMEM ceiling we request
_VMEM_BUDGET = 26 * 1024 * 1024      # what the tile-size heuristic targets


def _triple_cosine_mse_kernel(e1_ref, e2_ref, e3_ref, lab_ref, out_ref):
    b = pl.program_id(1)

    @pl.when(b == 0)
    def _init():
        out_ref[...] = jnp.zeros_like(out_ref)

    # Upcast AFTER the (possibly narrow-dtype) VMEM load.
    e1 = e1_ref[...].astype(jnp.float32)
    e2 = e2_ref[...].astype(jnp.float32)
    v = e3_ref[...].astype(jnp.float32)

    m = (e1 + e2) * 0.5                                    # mean(u', u'')  [TB, D]
    dot = jnp.sum(m * v, axis=-1, keepdims=True)           # [TB, 1]
    nm2 = jnp.sum(m * m, axis=-1, keepdims=True)           # ||m||^2
    nv2 = jnp.sum(v * v, axis=-1, keepdims=True)           # ||v||^2
    eps2 = jnp.float32(1e-8) * jnp.float32(1e-8)
    # cos = dot / (max(||m||, eps) * max(||v||, eps)), fused via one rsqrt.
    cos = dot * lax.rsqrt(jnp.maximum(nm2, eps2) * jnp.maximum(nv2, eps2))

    diff = cos - lab_ref[...]                               # [TB, 1]
    tile_sum = jnp.sum(diff * diff)                         # scalar partial

    # Accumulate this core's partial sum of squared errors. Every element of
    # the (8, 128) output tile carries the same value; the wrapper reads [0,0].
    out_ref[...] = out_ref[...] + tile_sum


def _pick_tile_rows(batch, feat, itemsize):
    """Rows per tile so the pipelined inputs + f32 working set fit VMEM.

    Per row we pay:
      * 3 inputs x 2 pipeline buffers in the native dtype, plus
      * roughly 6 f32-wide [TB, D] temporaries (upcasts, mean, products)
        that the compiler keeps live in VMEM/vregs while reducing.
    """
    per_row = 3 * 2 * feat * itemsize + 6 * feat * 4
    tb = _VMEM_BUDGET // max(per_row, 1)
    tb = min(tb, 1024, max(batch, _SUBLANES))
    tb = max(_SUBLANES, (tb // _SUBLANES) * _SUBLANES)
    return int(tb)


def cosine_similarity_triple_encoder_loss(emb0, emb1, emb2, labels):
    """emb0, emb1, emb2: [B, D] embeddings (any float dtype); labels: [B]."""
    B, D = emb0.shape
    emb_itemsize = jnp.dtype(emb0.dtype).itemsize
    tb = _pick_tile_rows(B, D, emb_itemsize)

    chunk = _NCORES * tb
    b_pad = ((B + chunk - 1) // chunk) * chunk
    steps = b_pad // chunk  # grid steps per core

    labels2d = labels.reshape(B, 1).astype(jnp.float32)
    if b_pad != B:
        pad = b_pad - B
        emb0 = jnp.pad(emb0, ((0, pad), (0, 0)))
        emb1 = jnp.pad(emb1, ((0, pad), (0, 0)))
        emb2 = jnp.pad(emb2, ((0, pad), (0, 0)))
        labels2d = jnp.pad(labels2d, ((0, pad), (0, 0)))
        # Padded rows: zero embeddings -> cos = 0, zero label -> diff = 0.

    emb_spec = pl.BlockSpec((tb, D), lambda c, b: (c * steps + b, 0))
    lab_spec = pl.BlockSpec((tb, 1), lambda c, b: (c * steps + b, 0))
    out_spec = pl.BlockSpec((_SUBLANES, _LANES), lambda c, b: (0, c))

    cost = pl.CostEstimate(
        flops=9 * b_pad * D,
        transcendentals=b_pad,
        bytes_accessed=(3 * b_pad * D * emb_itemsize
                        + b_pad * 4
                        + _SUBLANES * _NCORES * _LANES * 4),
    )

    partials = pl.pallas_call(
        _triple_cosine_mse_kernel,
        out_shape=jax.ShapeDtypeStruct((_SUBLANES, _NCORES * _LANES),
                                       jnp.float32),
        grid=(_NCORES, steps),
        in_specs=[emb_spec, emb_spec, emb_spec, lab_spec],
        out_specs=out_spec,
        compiler_params=pltpu.CompilerParams(
            dimension_semantics=("parallel", "arbitrary"),
            vmem_limit_bytes=_VMEM_LIMIT),
        cost_estimate=cost,
    )(emb0, emb1, emb2, labels2d)

    # Per-core partial sums live at lane offsets 0 and 128 of row 0.
    per_core = partials.reshape(_SUBLANES, _NCORES, _LANES)[0, :, 0]
    return jnp.sum(per_core) / jnp.float32(B)


def _reference(emb0, emb1, emb2, labels):
    m = (emb0.astype(jnp.float32) + emb1.astype(jnp.float32)) * 0.5
    v = emb2.astype(jnp.float32)
    dot = jnp.sum(m * v, axis=-1)
    nm = jnp.linalg.norm(m, axis=-1)
    nv = jnp.linalg.norm(v, axis=-1)
    eps = jnp.float32(1e-8)
    cos = dot / (jnp.maximum(nm, eps) * jnp.maximum(nv, eps))
    lab = labels.reshape(-1).astype(jnp.float32)
    return jnp.mean((cos - lab) ** 2)


if __name__ == "__main__":
    # TODO(synk): the SentenceTransformer encoder (self.model) is an external
    # module; this kernel consumes its output sentence embeddings directly.
    key = jax.random.PRNGKey(0)

    # Case 1: f32 embeddings, tile-aligned batch.
    B, D = 16, 256
    k0, k1, k2, k3 = jax.random.split(key, 4)
    e0 = jax.random.normal(k0, (B, D), dtype=jnp.float32)
    e1 = jax.random.normal(k1, (B, D), dtype=jnp.float32)
    e2 = jax.random.normal(k2, (B, D), dtype=jnp.float32)
    lab = jax.random.uniform(k3, (B,), dtype=jnp.float32)
    loss = cosine_similarity_triple_encoder_loss(e0, e1, e2, lab)
    jax.block_until_ready(loss)
    ref = _reference(e0, e1, e2, lab)
    assert jnp.allclose(loss, ref, atol=1e-5, rtol=1e-5), (loss, ref)

    # Case 2: batch not a multiple of the tile (exercises the padding path).
    B2, D2 = 13, 384
    k4, k5, k6, k7 = jax.random.split(jax.random.PRNGKey(1), 4)
    f0 = jax.random.normal(k4, (B2, D2), dtype=jnp.float32)
    f1 = jax.random.normal(k5, (B2, D2), dtype=jnp.float32)
    f2 = jax.random.normal(k6, (B2, D2), dtype=jnp.float32)
    lab2 = jax.random.uniform(k7, (B2,), dtype=jnp.float32)
    loss2 = cosine_similarity_triple_encoder_loss(f0, f1, f2, lab2)
    jax.block_until_ready(loss2)
    ref2 = _reference(f0, f1, f2, lab2)
    assert jnp.allclose(loss2, ref2, atol=1e-5, rtol=1e-5), (loss2, ref2)

    # Case 3: native bf16 embeddings (no wrapper upcast; kernel upcasts in VMEM).
    g0, g1, g2 = (x.astype(jnp.bfloat16) for x in (e0, e1, e2))
    loss3 = cosine_similarity_triple_encoder_loss(g0, g1, g2, lab)
    jax.block_until_ready(loss3)
    ref3 = _reference(g0, g1, g2, lab)
    assert jnp.allclose(loss3, ref3, atol=1e-4, rtol=1e-4), (loss3, ref3)

    print("KERNEL_OK")
</pallas_src>

<mosaic_0001>
module attributes {stable_mosaic.version = 11 : i64} {
  func.func @_triple_cosine_mse_kernel(%arg0: i32, %arg1: i32, %arg2: memref<16x256xf32, #tpu.memory_space<vmem>>, %arg3: memref<16x256xf32, #tpu.memory_space<vmem>>, %arg4: memref<16x256xf32, #tpu.memory_space<vmem>>, %arg5: memref<16x1xf32, #tpu.memory_space<vmem>>, %arg6: memref<8x128xf32, #tpu.memory_space<vmem>>) attributes {dimension_semantics = [#tpu.dimension_semantics<parallel>, #tpu.dimension_semantics<arbitrary>], iteration_bounds = array<i64: 2, 1>, scalar_prefetch = 0 : i64, scratch_operands = 0 : i64, tpu.core_type = #tpu.core_type<tc>, window_params = [{transform_indices = @transform_0, window_bounds = array<i64: 16, 256>}, {transform_indices = @transform_1, window_bounds = array<i64: 16, 256>}, {transform_indices = @transform_2, window_bounds = array<i64: 16, 256>}, {transform_indices = @transform_3, window_bounds = array<i64: 16, 1>}, {transform_indices = @transform_4, window_bounds = array<i64: 8, 128>}]} {
    %c0_i32 = arith.constant 0 : i32
    %0 = arith.cmpi eq, %arg1, %c0_i32 : i32
    %1 = arith.extui %0 : i1 to i32
    %c0_i32_0 = arith.constant 0 : i32
    %2 = arith.cmpi ne, %1, %c0_i32_0 : i32
    scf.if %2 {
      %cst_18 = arith.constant 0.000000e+00 : f32
      %37 = vector.broadcast %cst_18 : f32 to vector<8x128xf32>
      %c0_19 = arith.constant 0 : index
      %c0_20 = arith.constant 0 : index
      %38 = vector.load %arg6[%c0_19, %c0_20] : memref<8x128xf32, #tpu.memory_space<vmem>>, vector<8x128xf32>
      tpu.vector_store %arg6[%c0_19, %c0_20], %37 {strides = array<i32>} : memref<8x128xf32, #tpu.memory_space<vmem>>, vector<8x128xf32>,
    } else {
    }
    %c0 = arith.constant 0 : index
    %c0_1 = arith.constant 0 : index
    %3 = vector.load %arg2[%c0, %c0_1] : memref<16x256xf32, #tpu.memory_space<vmem>>, vector<16x256xf32>
    %c0_2 = arith.constant 0 : index
    %c0_3 = arith.constant 0 : index
    %4 = vector.load %arg3[%c0_2, %c0_3] : memref<16x256xf32, #tpu.memory_space<vmem>>, vector<16x256xf32>
    %c0_4 = arith.constant 0 : index
    %c0_5 = arith.constant 0 : index
    %5 = vector.load %arg4[%c0_4, %c0_5] : memref<16x256xf32, #tpu.memory_space<vmem>>, vector<16x256xf32>
    %6 = arith.addf %3, %4 : vector<16x256xf32>
    %cst = arith.constant 5.000000e-01 : f32
    %7 = vector.broadcast %cst : f32 to vector<16x256xf32>
    %8 = arith.mulf %6, %7 : vector<16x256xf32>
    %9 = arith.mulf %8, %5 : vector<16x256xf32>
    %cst_6 = arith.constant dense<0.000000e+00> : vector<16xf32>
    %10 = vector.multi_reduction <add>, %9, %cst_6 [1] : vector<16x256xf32> to vector<16xf32>
    %11 = vector.shape_cast %10 : vector<16xf32> to vector<16x1xf32>
    %12 = arith.mulf %8, %8 : vector<16x256xf32>
    %cst_7 = arith.constant dense<0.000000e+00> : vector<16xf32>
    %13 = vector.multi_reduction <add>, %12, %cst_7 [1] : vector<16x256xf32> to vector<16xf32>
    %14 = vector.shape_cast %13 : vector<16xf32> to vector<16x1xf32>
    %15 = arith.mulf %5, %5 : vector<16x256xf32>
    %cst_8 = arith.constant dense<0.000000e+00> : vector<16xf32>
    %16 = vector.multi_reduction <add>, %15, %cst_8 [1] : vector<16x256xf32> to vector<16xf32>
    %17 = vector.shape_cast %16 : vector<16xf32> to vector<16x1xf32>
    %cst_9 = arith.constant 9.99999993E-9 : f32
    %cst_10 = arith.constant 9.99999993E-9 : f32
    %18 = arith.mulf %cst_9, %cst_10 : f32
    %19 = vector.broadcast %18 : f32 to vector<16x1xf32>
    %20 = arith.maximumf %14, %19 : vector<16x1xf32>
    %21 = vector.broadcast %18 : f32 to vector<16x1xf32>
    %22 = arith.maximumf %17, %21 : vector<16x1xf32>
    %23 = arith.mulf %20, %22 : vector<16x1xf32>
    %24 = math.rsqrt %23 : vector<16x1xf32>
    %25 = arith.mulf %11, %24 : vector<16x1xf32>
    %c0_11 = arith.constant 0 : index
    %c0_12 = arith.constant 0 : index
    %26 = vector.load %arg5[%c0_11, %c0_12] : memref<16x1xf32, #tpu.memory_space<vmem>>, vector<16x1xf32>
    %27 = arith.subf %25, %26 : vector<16x1xf32>
    %28 = arith.mulf %27, %27 : vector<16x1xf32>
    %29 = vector.shape_cast %28 : vector<16x1xf32> to vector<1x16x1xf32>
    %cst_13 = arith.constant dense<0.000000e+00> : vector<1xf32>
    %30 = vector.multi_reduction <add>, %29, %cst_13 [1, 2] : vector<1x16x1xf32> to vector<1xf32>
    %31 = vector.shape_cast %30 : vector<1xf32> to vector<1x1x1xf32>
    %32 = vector.extract %31[0, 0, 0] : f32 from vector<1x1x1xf32>
    %c0_14 = arith.constant 0 : index
    %c0_15 = arith.constant 0 : index
    %33 = vector.load %arg6[%c0_14, %c0_15] : memref<8x128xf32, #tpu.memory_space<vmem>>, vector<8x128xf32>
    %34 = vector.broadcast %32 : f32 to vector<8x128xf32>
    %35 = arith.addf %33, %34 : vector<8x128xf32>
    %c0_16 = arith.constant 0 : index
    %c0_17 = arith.constant 0 : index
    %36 = vector.load %arg6[%c0_16, %c0_17] : memref<8x128xf32, #tpu.memory_space<vmem>>, vector<8x128xf32>
    tpu.vector_store %arg6[%c0_16, %c0_17], %35 {strides = array<i32>} : memref<8x128xf32, #tpu.memory_space<vmem>>, vector<8x128xf32>,
    return
  }
  func.func @transform_0(%arg0: i32, %arg1: i32) -> (i32, i32) {
    %c1_i32 = arith.constant 1 : i32
    %0 = arith.muli %arg0, %c1_i32 : i32
    %1 = arith.addi %0, %arg1 : i32
    %c0_i32 = arith.constant 0 : i32
    %c0_i32_0 = arith.constant 0 : i32
    return %1, %c0_i32 : i32, i32
  }
  func.func @transform_1(%arg0: i32, %arg1: i32) -> (i32, i32) {
    %c1_i32 = arith.constant 1 : i32
    %0 = arith.muli %arg0, %c1_i32 : i32
    %1 = arith.addi %0, %arg1 : i32
    %c0_i32 = arith.constant 0 : i32
    %c0_i32_0 = arith.constant 0 : i32
    return %1, %c0_i32 : i32, i32
  }
  func.func @transform_2(%arg0: i32, %arg1: i32) -> (i32, i32) {
    %c1_i32 = arith.constant 1 : i32
    %0 = arith.muli %arg0, %c1_i32 : i32
    %1 = arith.addi %0, %arg1 : i32
    %c0_i32 = arith.constant 0 : i32
    %c0_i32_0 = arith.constant 0 : i32
    return %1, %c0_i32 : i32, i32
  }
  func.func @transform_3(%arg0: i32, %arg1: i32) -> (i32, i32) {
    %c1_i32 = arith.constant 1 : i32
    %0 = arith.muli %arg0, %c1_i32 : i32
    %1 = arith.addi %0, %arg1 : i32
    %c0_i32 = arith.constant 0 : i32
    %c0_i32_0 = arith.constant 0 : i32
    return %1, %c0_i32 : i32, i32
  }
  func.func @transform_4(%arg0: i32, %arg1: i32) -> (i32, i32) {
    %c0_i32 = arith.constant 0 : i32
    %c0_i32_0 = arith.constant 0 : i32
    return %c0_i32, %arg0 : i32, i32
  }
}

</mosaic_0001>

<llo_original>
// kernel: tpu_custom_call.1
$region0: #{tpu_custom_call.1}
  #allocation0 [shape = 'u32[]', space=smem, size = 0x4, offset = 0x4, fixed_abs, tag = 'smem constant byte address 0x4 - core index']
  #allocation1 [shape = 'u32[144,128]{1,0:T(1,128)}', space=vmem, size = 0x12000, scoped, tag = 'internal scratch']
  %s0 = inlined_call_operand.hbm [shape: f32[32,256], index: 0, kind: input, shape index: {}]
  %s1 = inlined_call_operand.hbm [shape: f32[32,256], index: 1, kind: input, shape index: {}]
  %s2 = inlined_call_operand.hbm [shape: f32[32,256], index: 2, kind: input, shape index: {}]
  %s3 = inlined_call_operand.vmem [shape: f32[32,1], index: 3, kind: input, shape index: {}]
  %s4 = inlined_call_operand.hbm [shape: f32[8,256], index: 4, kind: output, shape index: {}]
  %s5 = sld [smem:[#allocation0]]
  $region65: #{tpu_custom_call.1} parent=0
    _
  %s7 = ssub.s32 1, %s5
  %s8 = scalar_select 0, %s7, %s5
  $region1: #{tpu_custom_call.1} parent=0
    #allocation2 [shape = 'u8[32768]{0}', space=vmem, size = 0x8000, scoped, tag = 'input window, operand 0']
    #allocation3 [shape = 's32[2]{0}', space=sflag, size = 0x8, scoped, tag = 'scoped memory for tpu_custom_call.1']
    #allocation4 [shape = 's32[2]{0}', space=sflag, size = 0x8, scoped, tag = 'scoped memory for tpu_custom_call.1']
    #allocation5 [shape = 'u8[32768]{0}', space=vmem, size = 0x8000, scoped, tag = 'input window, operand 1']
    #allocation6 [shape = 's32[2]{0}', space=sflag, size = 0x8, scoped, tag = 'scoped memory for tpu_custom_call.1']
    #allocation7 [shape = 'u8[32768]{0}', space=vmem, size = 0x8000, scoped, tag = 'input window, operand 2']
    #allocation8 [shape = 'u8[8192]{0}', space=vmem, size = 0x2000, scoped, tag = 'output window, operand 0']
    %9 = vsyncpa [#allocation3], 0
    %s10 = scalar_lea.sflag [#allocation3], 1
    %11 = vsyncpa %s10, 0
    %12 = vsyncpa [#allocation6], 0
    %s13 = scalar_lea.sflag [#allocation6], 1
    %14 = vsyncpa %s13, 0
    %15 = vsyncpa [#allocation4], 0
    %s16 = scalar_lea.sflag [#allocation4], 1
    %17 = vsyncpa %s16, 0
    loop: start=0, step=1, limit=4
    $region2: #{tpu_custom_call.1} parent=1 // loop_pre_header
      _
    $region3: #{tpu_custom_call.1} parent=1 // loop_header
      %s19 = sphi 0, %s23
      %p20 = scmp.ge.s32.totalorder %s19, 4
      %s26 = sphi 0, %s38
      %s27 = sphi 0, %s34
      %s28 = sphi 0, %s26
      %s29 = sphi 0, %s27
      %s30 = sphi 0, %s28
      %s31 = sphi 0, %s29
      %s43 = sphi 0, %s45
      %s46 = sphi 0, %s43
      %s47 = sphi 0, %s46
      %s63 = sphi 0, %s47
      %s71 = sphi 0, %s73
      %s74 = sphi 0, %s71
      %s75 = sphi 0, %s74
      %s91 = sphi 0, %s75
      %s99 = sphi 0, %s101
      %s102 = sphi 0, %s99
      %s103 = sphi 0, %s102
      %s119 = sphi 0, %s103
      %s127 = sphi 0, %s129
      %s130 = sphi 0, %s127
      %s131 = sphi 0, %s130
      %s147 = sphi 0, %s131
      %s153 = sphi 0, %s155
      %s156 = sphi 0, %s153
      %s157 = sphi 0, %s156
      %s173 = sphi 0, %s157
    $region4: #{tpu_custom_call.1} parent=1 // loop_header_branch
      %22 = sbr.rel (%p20) target = $region8
    $region5: #{tpu_custom_call.1} parent=1 // loop_body
      %s24 = ssub.s32 %s19, 1
      %s25 = ssub.s32 %s19, 2
      %s32 = sadd.s32 1, %s27
      %p33 = scmp.ge.s32.totalorder %s32, 1
      %s34 = scalar_select %p33, 0, %s32
      %s35 = sadd.s32 1, %s26
      %s36 = scalar_select %p33, %s35, %s26
      %p37 = scmp.ge.s32.totalorder %s36, 2
      %s38 = scalar_select %p37, 0, %s36
      %s39 = sadd.s32 %s26, %s27
      %s40 = sadd.s32 %s38, %s34
      %s41 = ssub.s32 %s39, %s40
      %p42 = scmp.eq.s32.totalorder %s41, 0
      %s44 = sadd.s32 %s43, 1
      %s45 = scalar_select %p42, %s43, %s44
      %p48 = pneg %p42
      %p49 = scmp.eq.s32.totalorder %s19, 1
      %p50 = por %p48, %p49
      %p51 = scmp.ne.s32.totalorder %s43, %s46
      %p52 = scmp.eq.s32.totalorder %s19, 0
      %p53 = por %p51, %p52
      %p54 = scmp.ne.s32.totalorder %s43, %s46
      %p55 = scmp.eq.s32.totalorder %s24, 1
      %p56 = por %p54, %p55
      %p57 = scmp.ne.s32.totalorder %s46, %s47
      %p58 = scmp.eq.s32.totalorder %s24, 0
      %p59 = por %p57, %p58
      %p60 = scmp.ne.s32.totalorder %s46, %s47
      %p61 = scmp.eq.s32.totalorder %s25, 1
      %p62 = por %p60, %p61
      %p64 = scmp.ne.s32.totalorder %s47, %s63
      %p65 = scmp.eq.s32.totalorder %s25, 0
      %p66 = por %p64, %p65
      %s67 = sadd.s32 %s26, %s27
      %s68 = sadd.s32 %s38, %s34
      %s69 = ssub.s32 %s67, %s68
      %p70 = scmp.eq.s32.totalorder %s69, 0
      %s72 = sadd.s32 %s71, 1
      %s73 = scalar_select %p70, %s71, %s72
      %p76 = pneg %p70
      %p77 = scmp.eq.s32.totalorder %s19, 1
      %p78 = por %p76, %p77
      %p79 = scmp.ne.s32.totalorder %s71, %s74
      %p80 = scmp.eq.s32.totalorder %s19, 0
      %p81 = por %p79, %p80
      %p82 = scmp.ne.s32.totalorder %s71, %s74
      %p83 = scmp.eq.s32.totalorder %s24, 1
      %p84 = por %p82, %p83
      %p85 = scmp.ne.s32.totalorder %s74, %s75
      %p86 = scmp.eq.s32.totalorder %s24, 0
      %p87 = por %p85, %p86
      %p88 = scmp.ne.s32.totalorder %s74, %s75
      %p89 = scmp.eq.s32.totalorder %s25, 1
      %p90 = por %p88, %p89
      %p92 = scmp.ne.s32.totalorder %s75, %s91
      %p93 = scmp.eq.s32.totalorder %s25, 0
      %p94 = por %p92, %p93
      %s95 = sadd.s32 %s26, %s27
      %s96 = sadd.s32 %s38, %s34
      %s97 = ssub.s32 %s95, %s96
      %p98 = scmp.eq.s32.totalorder %s97, 0
      %s100 = sadd.s32 %s99, 1
      %s101 = scalar_select %p98, %s99, %s100
      %p104 = pneg %p98
      %p105 = scmp.eq.s32.totalorder %s19, 1
      %p106 = por %p104, %p105
      %p107 = scmp.ne.s32.totalorder %s99, %s102
      %p108 = scmp.eq.s32.totalorder %s19, 0
      %p109 = por %p107, %p108
      %p110 = scmp.ne.s32.totalorder %s99, %s102
      %p111 = scmp.eq.s32.totalorder %s24, 1
      %p112 = por %p110, %p111
      %p113 = scmp.ne.s32.totalorder %s102, %s103
      %p114 = scmp.eq.s32.totalorder %s24, 0
      %p115 = por %p113, %p114
      %p116 = scmp.ne.s32.totalorder %s102, %s103
      %p117 = scmp.eq.s32.totalorder %s25, 1
      %p118 = por %p116, %p117
      %p120 = scmp.ne.s32.totalorder %s103, %s119
      %p121 = scmp.eq.s32.totalorder %s25, 0
      %p122 = por %p120, %p121
      %s123 = sadd.s32 %s26, %s27
      %s124 = sadd.s32 %s38, %s34
      %s125 = ssub.s32 %s123, %s124
      %p126 = scmp.eq.s32.totalorder %s125, 0
      %s128 = sadd.s32 %s127, 1
      %s129 = scalar_select %p126, %s127, %s128
      %p132 = pneg %p126
      %p133 = scmp.eq.s32.totalorder %s19, 1
      %p134 = por %p132, %p133
      %p135 = scmp.ne.s32.totalorder %s127, %s130
      %p136 = scmp.eq.s32.totalorder %s19, 0
      %p137 = por %p135, %p136
      %p138 = scmp.ne.s32.totalorder %s127, %s130
      %p139 = scmp.eq.s32.totalorder %s24, 1
      %p140 = por %p138, %p139
      %p141 = scmp.ne.s32.totalorder %s130, %s131
      %p142 = scmp.eq.s32.totalorder %s24, 0
      %p143 = por %p141, %p142
      %p144 = scmp.ne.s32.totalorder %s130, %s131
      %p145 = scmp.eq.s32.totalorder %s25, 1
      %p146 = por %p144, %p145
      %p148 = scmp.ne.s32.totalorder %s131, %s147
      %p149 = scmp.eq.s32.totalorder %s25, 0
      %p150 = por %p148, %p149
      %s151 = ssub.s32 %s26, %s38
      %p152 = scmp.eq.s32.totalorder %s151, 0
      %s154 = sadd.s32 %s153, 1
      %s155 = scalar_select %p152, %s153, %s154
      %p158 = pneg %p152
      %p159 = scmp.eq.s32.totalorder %s19, 1
      %p160 = por %p158, %p159
      %p161 = scmp.ne.s32.totalorder %s153, %s156
      %p162 = scmp.eq.s32.totalorder %s19, 0
      %p163 = por %p161, %p162
      %p164 = scmp.ne.s32.totalorder %s153, %s156
      %p165 = scmp.eq.s32.totalorder %s24, 1
      %p166 = por %p164, %p165
      %p167 = scmp.ne.s32.totalorder %s156, %s157
      %p168 = scmp.eq.s32.totalorder %s24, 0
      %p169 = por %p167, %p168
      %p170 = scmp.ne.s32.totalorder %s156, %s157
      %p171 = scmp.eq.s32.totalorder %s25, 1
      %p172 = por %p170, %p171
      %p174 = scmp.ne.s32.totalorder %s157, %s173
      %p175 = scmp.eq.s32.totalorder %s25, 0
      %p176 = por %p174, %p175
      %p177 = scmp.le.s32.totalorder 1, %s19
      %p178 = scmp.lt.s32.totalorder %s19, 3
      %p179 = pnand %p177, %p178
      %p180 = pneg %p179
      // Predicated region
      $region9: #{tpu_custom_call.1} parent=5 // pred_check
        _
      $region10: #{tpu_custom_call.1} parent=5 // pred_check_branch
        %182 = sbr.rel (%p179) target = $region12
      $region11: #{tpu_custom_call.1} parent=5 // pred_region
        %s183 = ssub.s32 %s19, 1
      $region12: #{tpu_custom_call.1} parent=5 // pred_fallthru
        _
      %p184 = scmp.lt.s32.totalorder %s19, 2
      // Predicated region
      $region13: #{tpu_custom_call.1} parent=5 // pred_check
        %p185 = pneg %p184
      $region14: #{tpu_custom_call.1} parent=5 // pred_check_branch
        %187 = sbr.rel (%p185) target = $region16
      $region15: #{tpu_custom_call.1} parent=5 // pred_region
        // Predicated region
        $region17: #{tpu_custom_call.1} parent=15 // pred_check
          %p188 = pneg %p53
        $region18: #{tpu_custom_call.1} parent=15 // pred_check_branch
          %190 = sbr.rel (%p188) target = $region20
        $region19: #{tpu_custom_call.1} parent=15 // pred_region
          %s191 = sand.u32 %s43, 1
          %s192 = scalar_lea.sflag [#allocation3], %s191
          %s193 = sand.u32 %s43, 1
          %s194 = smul.addr %s193, 32
          %s195 = scalar_lea.vmem [#allocation2], %s194
          %s196 = sadd.s32 %s26, %s27
          %s197 = smul.u32 2, %s196
          %s199 = ssub.s32 512, 512
          %200 = vsyncadd %s192, %s199
          %s201 = smul.addr %s197, 2
          %s202 = smul.addr %s201, 128
          %s203 = scalar_lea.hbm %s0, %s202
          %s204 = sshll.u32 %s195, 4
          %s205 = int_to_ptr.vmem [resolvable:$true] %s204
          %210 = dma.hbm_to_vmem [thread:$0]  %s203, 512, %s205, %s192, 256, 256, 16
        $region20: #{tpu_custom_call.1} parent=15 // pred_fallthru
          _
        // Predicated region
        $region21: #{tpu_custom_call.1} parent=15 // pred_check
          %p211 = pneg %p81
        $region22: #{tpu_custom_call.1} parent=15 // pred_check_branch
          %213 = sbr.rel (%p211) target = $region24
        $region23: #{tpu_custom_call.1} parent=15 // pred_region
          %s214 = sand.u32 %s19, 1
          %s215 = scalar_lea.sflag [#allocation6], %s214
          %s216 = sand.u32 %s71, 1
          %s217 = smul.addr %s216, 32
          %s218 = scalar_lea.vmem [#allocation5], %s217
          %s219 = sadd.s32 %s26, %s27
          %s220 = smul.u32 2, %s219
          %s222 = ssub.s32 512, 512
          %223 = vsyncadd %s215, %s222
          %s224 = smul.addr %s220, 2
          %s225 = smul.addr %s224, 128
          %s226 = scalar_lea.hbm %s1, %s225
          %s227 = sshll.u32 %s218, 4
          %s228 = int_to_ptr.vmem [resolvable:$true] %s227
          %233 = dma.hbm_to_vmem [thread:$0]  %s226, 512, %s228, %s215, 256, 256, 16
        $region24: #{tpu_custom_call.1} parent=15 // pred_fallthru
          _
        // Predicated region
        $region25: #{tpu_custom_call.1} parent=15 // pred_check
          %p234 = pneg %p109
        $region26: #{tpu_custom_call.1} parent=15 // pred_check_branch
          %236 = sbr.rel (%p234) target = $region28
        $region27: #{tpu_custom_call.1} parent=15 // pred_region
          %s237 = sand.u32 %s19, 1
          %s238 = scalar_lea.sflag [#allocation6], %s237
          %s239 = sand.u32 %s99, 1
          %s240 = smul.addr %s239, 32
          %s241 = scalar_lea.vmem [#allocation7], %s240
          %s242 = sadd.s32 %s26, %s27
          %s243 = smul.u32 2, %s242
          %s245 = ssub.s32 512, 512
          %246 = vsyncadd %s238, %s245
          %s247 = smul.addr %s243, 2
          %s248 = smul.addr %s247, 128
          %s249 = scalar_lea.hbm %s2, %s248
          %s250 = sshll.u32 %s241, 4
          %s251 = int_to_ptr.vmem [resolvable:$true] %s250
          %256 = dma.hbm_to_vmem [thread:$0]  %s249, 512, %s251, %s238, 256, 256, 16
        $region28: #{tpu_custom_call.1} parent=15 // pred_fallthru
          _
        // Predicated region
        $region29: #{tpu_custom_call.1} parent=15 // pred_check
          %p257 = pneg %p137
        $region30: #{tpu_custom_call.1} parent=15 // pred_check_branch
          %259 = sbr.rel (%p257) target = $region32
        $region31: #{tpu_custom_call.1} parent=15 // pred_region
          %s260 = sadd.s32 %s26, %s27
          %s261 = smul.u32 2, %s260
          %p262 = scmp.lt.s32.totalorder %s261, 3
          %s263 = scalar_select %p262, %s261, 3
          %s264 = smul.addr %s263, 8
          %s265 = scalar_lea.vmem %s3, %s264
          %s266 = sadd.s32 %s26, %s27
          %s267 = smul.u32 2, %s266
        $region32: #{tpu_custom_call.1} parent=15 // pred_fallthru
          _
      $region16: #{tpu_custom_call.1} parent=5 // pred_fallthru
        _
      %p268 = scmp.le.s32.totalorder 1, %s19
      %p269 = scmp.lt.s32.totalorder %s19, 3
      %p270 = pnand %p268, %p269
      %p271 = pneg %p270
      // Predicated region
      $region33: #{tpu_custom_call.1} parent=5 // pred_check
        _
      $region34: #{tpu_custom_call.1} parent=5 // pred_check_branch
        %273 = sbr.rel (%p270) target = $region36
      $region35: #{tpu_custom_call.1} parent=5 // pred_region
        %s274 = ssub.s32 %s19, 1
        %s275 = sand.u32 %s46, 1
        %s276 = scalar_lea.sflag [#allocation3], %s275
        %s277 = sand.u32 %s46, 1
        %s278 = smul.addr %s277, 32
        %s279 = scalar_lea.vmem [#allocation2], %s278
        // Predicated region
        $region37: #{tpu_custom_call.1} parent=35 // pred_check
          %p280 = pneg %p59
        $region38: #{tpu_custom_call.1} parent=35 // pred_check_branch
          %282 = sbr.rel (%p280) target = $region40
        $region39: #{tpu_custom_call.1} parent=35 // pred_region
          %283 = dma.done %s276, 512
        $region40: #{tpu_custom_call.1} parent=35 // pred_fallthru
          _
        %s284 = sand.u32 %s24, 1
        %s285 = scalar_lea.sflag [#allocation6], %s284
        %s286 = sand.u32 %s74, 1
        %s287 = smul.addr %s286, 32
        %s288 = scalar_lea.vmem [#allocation5], %s287
        // Predicated region
        $region41: #{tpu_custom_call.1} parent=35 // pred_check
          %p289 = pneg %p87
        $region42: #{tpu_custom_call.1} parent=35 // pred_check_branch
          %291 = sbr.rel (%p289) target = $region44
        $region43: #{tpu_custom_call.1} parent=35 // pred_region
          %292 = dma.done %s285, 512
        $region44: #{tpu_custom_call.1} parent=35 // pred_fallthru
          _
        %s293 = sand.u32 %s24, 1
        %s294 = scalar_lea.sflag [#allocation6], %s293
        %s295 = sand.u32 %s102, 1
        %s296 = smul.addr %s295, 32
        %s297 = scalar_lea.vmem [#allocation7], %s296
        // Predicated region
        $region45: #{tpu_custom_call.1} parent=35 // pred_check
          %p298 = pneg %p115
        $region46: #{tpu_custom_call.1} parent=35 // pred_check_branch
          %300 = sbr.rel (%p298) target = $region48
        $region47: #{tpu_custom_call.1} parent=35 // pred_region
          %301 = dma.done %s294, 512
        $region48: #{tpu_custom_call.1} parent=35 // pred_fallthru
          _
        %s302 = sand.u32 %s46, 1
        %s303 = scalar_lea.sflag [#allocation3], %s302
        %s304 = sand.u32 %s46, 1
        %s305 = smul.addr %s304, 32
        %s306 = scalar_lea.vmem [#allocation2], %s305
        %p307 = pneg %p59
        %p308 = pneg %p56
        %s309 = sand.u32 %s24, 1
        %s310 = scalar_lea.sflag [#allocation6], %s309
        %s311 = sand.u32 %s74, 1
        %s312 = smul.addr %s311, 32
        %s313 = scalar_lea.vmem [#allocation5], %s312
        %p314 = pneg %p87
        %p315 = pneg %p84
        %s316 = sand.u32 %s24, 1
        %s317 = scalar_lea.sflag [#allocation6], %s316
        %s318 = sand.u32 %s102, 1
        %s319 = smul.addr %s318, 32
        %s320 = scalar_lea.vmem [#allocation7], %s319
        %p321 = pneg %p115
        %p322 = pneg %p112
        %s323 = sadd.s32 %s28, %s29
        %s324 = smul.u32 2, %s323
        %p325 = scmp.lt.s32.totalorder %s324, 3
        %s326 = scalar_select %p325, %s324, 3
        %s327 = smul.addr %s326, 8
        %s328 = scalar_lea.vmem %s3, %s327
        %p329 = pneg %p143
        %p330 = pneg %p140
        %p331 = pneg %p169
        %p332 = pneg %p166
        %s333 = sand.u32 %s156, 1
        %s334 = scalar_lea.sflag [#allocation4], %s333
        %s335 = sand.u32 %s156, 1
        %s336 = smul.addr %s335, 8
        %s337 = scalar_lea.vmem [#allocation8], %s336
        %s338 = sadd.s32 %s28, %s29
        %s339 = smul.u32 2, %s338
        %s340 = sadd.s32 %s28, %s29
        %s341 = smul.u32 2, %s340
        %s342 = sadd.s32 %s28, %s29
        %s343 = smul.u32 2, %s342
        %s344 = sadd.s32 %s28, %s29
        %s345 = smul.u32 2, %s344
        %p346 = scmp.lt.s32.totalorder %s345, 3
        %s347 = scalar_select %p346, %s345, 3
        %s348 = smul.addr %s347, 8
        %s349 = scalar_lea.vmem %s3, %s348
        %s350 = sadd.s32 %s28, %s29
        %s351 = smul.u32 2, %s350
        %p352 = scmp.eq.s32.totalorder %s29, 0
        // Predicated region
        $region49: #{tpu_custom_call.1} parent=35 // pred_check
          %p353 = pneg %p352
        $region50: #{tpu_custom_call.1} parent=35 // pred_check_branch
          %355 = sbr.rel (%p353) target = $region52
        $region51: #{tpu_custom_call.1} parent=35 // pred_region
          %356 = vst [vmem:[%s337] sm:$0xff] 0.0
        $region52: #{tpu_custom_call.1} parent=35 // pred_fallthru
          _
        %v357 = vld [vmem:[%s279] sm:$0xff]
        %v358 = vld [vmem:[%s279 + $0x8] sm:$0xff]
        %v359 = vld [vmem:[%s279 + $0x10] sm:$0xff]
        %v360 = vld [vmem:[%s279 + $0x18] sm:$0xff]
        %v361 = vld [vmem:[%s288] sm:$0xff]
        %v362 = vld [vmem:[%s288 + $0x8] sm:$0xff]
        %v363 = vld [vmem:[%s288 + $0x10] sm:$0xff]
        %v364 = vld [vmem:[%s288 + $0x18] sm:$0xff]
        %v365 = vld [vmem:[%s297] sm:$0xff]
        %v366 = vld [vmem:[%s297 + $0x8] sm:$0xff]
        %v367 = vld [vmem:[%s297 + $0x10] sm:$0xff]
        %v368 = vld [vmem:[%s297 + $0x18] sm:$0xff]
        %v369 = vadd.f32 %v357, %v361
        %v370 = vadd.f32 %v358, %v362
        %v371 = vadd.f32 %v359, %v363
        %v372 = vadd.f32 %v360, %v364
        %v373 = vmul.f32 %v369, 0.5
        %v374 = vmul.f32 %v370, 0.5
        %v375 = vmul.f32 %v371, 0.5
        %v376 = vmul.f32 %v372, 0.5
        %v377 = vmul.f32 %v373, %v365
        %v378 = vmul.f32 %v374, %v366
        %v379 = vmul.f32 %v375, %v367
        %v380 = vmul.f32 %v376, %v368
        %v381 = vadd.f32 %v377, %v378
        %382 = vadd.xlane.f32.xlu0 %v381
        %v383 = vpop.xlane.xlu0 %382
        %v384 = vadd.f32 %v379, %v380
        %385 = vadd.xlane.f32.xlu0 %v384
        %v386 = vpop.xlane.xlu0 %385
        %v387 = vmul.f32 %v373, %v373
        %v388 = vmul.f32 %v374, %v374
        %v389 = vmul.f32 %v375, %v375
        %v390 = vmul.f32 %v376, %v376
        %v391 = vadd.f32 %v387, %v388
        %392 = vadd.xlane.f32.xlu0 %v391
        %v393 = vpop.xlane.xlu0 %392
        %v394 = vadd.f32 %v389, %v390
        %395 = vadd.xlane.f32.xlu0 %v394
        %v396 = vpop.xlane.xlu0 %395
        %v397 = vmul.f32 %v365, %v365
        %v398 = vmul.f32 %v366, %v366
        %v399 = vmul.f32 %v367, %v367
        %v400 = vmul.f32 %v368, %v368
        %v401 = vadd.f32 %v397, %v398
        %402 = vadd.xlane.f32.xlu0 %v401
        %v403 = vpop.xlane.xlu0 %402
        %v404 = vadd.f32 %v399, %v400
        %405 = vadd.xlane.f32.xlu0 %v404
        %v406 = vpop.xlane.xlu0 %405
        %v407 = vmax.f32 %v393, 1e-16
        %v408 = vmax.f32 %v396, 1e-16
        %v409 = vmax.f32 %v403, 1e-16
        %v410 = vmax.f32 %v406, 1e-16
        %v411 = vmul.f32 %v407, %v409
        %v412 = vmul.f32 %v408, %v410
        %v413 = vrsqrt.pop %v411
        %v414 = vrsqrt.pop %v412
        %v415 = vmul.f32 %v383, %v413
        %v416 = vmul.f32 %v386, %v414
        %v417 = vld [vmem:[%s349] sm:$0xff]
        %v418 = vld [vmem:[%s349 + $0x8] sm:$0xff]
        %v419 = vsub.f32 %v415, %v417
        %v420 = vsub.f32 %v416, %v418
        %v421 = vmul.f32 %v419, %v419
        %v422 = vmul.f32 %v420, %v420
        %vm423 = vcmask 7168
        %v424 = vsel %vm423, %v421, 0.0
        %v425 = vsel %vm423, %v422, 0.0
        %v426 = vadd.f32 %v424, %v425
        %427 = vadd.xlane.f32.xlu0 %v426
        %v428 = vpop.xlane.xlu0 %427
        %v429 = vrot.slane %v428, 4
        %v430 = vadd.f32 %v428, %v429
        %v431 = vrot.slane %v430, 2
        %v432 = vadd.f32 %v430, %v431
        %v433 = vrot.slane %v432, 1
        %v434 = vadd.f32 %v432, %v433
        %s435 = vtos %v434
        %v436 = vld [vmem:[%s337] sm:$0xff]
        %v437 = vstv %s435
        %v438 = vadd.f32 %v436, %v437
        %439 = vst [vmem:[%s337] sm:$0xff] %v438
        %s440 = sand.u32 %s156, 1
        %s441 = scalar_lea.sflag [#allocation4], %s440
        %s442 = sand.u32 %s156, 1
        %s443 = smul.addr %s442, 8
        %s444 = scalar_lea.vmem [#allocation8], %s443
        // Predicated region
        $region53: #{tpu_custom_call.1} parent=35 // pred_check
          %p445 = pneg %p166
        $region54: #{tpu_custom_call.1} parent=35 // pred_check_branch
          %447 = sbr.rel (%p445) target = $region56
        $region55: #{tpu_custom_call.1} parent=35 // pred_region
          %s449 = ssub.s32 128, 128
          %450 = vsyncadd %s441, %s449
          %s451 = smul.addr %s28, 128
          %s452 = scalar_lea.hbm %s4, %s451
          %s454 = sshll.u32 %s444, 4
          %s455 = int_to_ptr.vmem [resolvable:$true] %s454
          %457 = dma.vmem_to_hbm [thread:$0]  %s455, 128, %s452, %s441
        $region56: #{tpu_custom_call.1} parent=35 // pred_fallthru
          _
      $region36: #{tpu_custom_call.1} parent=5 // pred_fallthru
        _
      %p458 = scmp.le.s32.totalorder 2, %s19
      // Predicated region
      $region57: #{tpu_custom_call.1} parent=5 // pred_check
        %p459 = pneg %p458
      $region58: #{tpu_custom_call.1} parent=5 // pred_check_branch
        %461 = sbr.rel (%p459) target = $region60
      $region59: #{tpu_custom_call.1} parent=5 // pred_region
        %s462 = ssub.s32 %s19, 2
        // Predicated region
        $region61: #{tpu_custom_call.1} parent=59 // pred_check
          %p463 = pneg %p172
        $region62: #{tpu_custom_call.1} parent=59 // pred_check_branch
          %465 = sbr.rel (%p463) target = $region64
        $region63: #{tpu_custom_call.1} parent=59 // pred_region
          %s466 = sand.u32 %s157, 1
          %s467 = scalar_lea.sflag [#allocation4], %s466
          %s468 = sand.u32 %s157, 1
          %s469 = smul.addr %s468, 8
          %s470 = scalar_lea.vmem [#allocation8], %s469
          %471 = dma.done %s467, 128
        $region64: #{tpu_custom_call.1} parent=59 // pred_fallthru
          _
      $region60: #{tpu_custom_call.1} parent=5 // pred_fallthru
        _
    $region6: #{tpu_custom_call.1} parent=1 // loop_footer
      %s23 = sadd.s32 1, %s19
    $region7: #{tpu_custom_call.1} parent=1 // loop_footer_branch
      %18 = sbr.rel target = $region3
    $region8: #{tpu_custom_call.1} parent=1 // loop_exit
      _
    %472 = vsyncpa [#allocation3], 1
    %s473 = scalar_lea.sflag [#allocation3], 1
    %474 = vsyncpa %s473, 1
    %475 = vsyncpa [#allocation6], 1
    %s476 = scalar_lea.sflag [#allocation6], 1
    %477 = vsyncpa %s476, 1
    %478 = vsyncpa [#allocation4], 1
    %s479 = scalar_lea.sflag [#allocation4], 1
    %480 = vsyncpa %s479, 1

</llo_original>
